<compile_context>
chip_gen: v5e
topology: v5e:2x2
jax: 0.10.0
libtpu: 0.0.40
codegen_flags: <defaults>
</compile_context>

<pallas_src>
import math

import jax
import jax.numpy as jnp
from jax.experimental import pallas as pl
from jax.experimental.pallas import tpu as pltpu

# Finite stand-in for -inf on padded vocab columns: exp(NEG_BIG - m) underflows
# to exactly 0 (so the LSE is untouched) without any inf-inf NaN risk.
NEG_BIG = -1e30


def _round_up(n, m):
    return ((n + m - 1) // m) * m


def _round_down(n, m):
    return max(m, (n // m) * m)


def _single_buffered_spec(block_shape, index_map):
    """BlockSpec for a grid-constant block: a single VMEM buffer is enough
    (double-buffering a constant block is pure VMEM waste).  Falls back to a
    plain BlockSpec if this Pallas version does not accept pipeline_mode."""
    buffered = getattr(pl, "Buffered", None)
    if buffered is not None:
        try:
            return pl.BlockSpec(block_shape, index_map, pipeline_mode=buffered(1))
        except TypeError:
            pass
    return pl.BlockSpec(block_shape, index_map)


def _vmem_budget_bytes():
    """Per-chip VMEM budget with headroom for compiler scratch / pipelining."""
    phys = None
    try:
        info = pltpu.get_tpu_info()
        phys = int(getattr(info, "vmem_capacity_bytes"))
    except Exception:
        phys = None
    if not phys or phys <= 0:
        phys = 64 << 20  # conservative default (v7x per-TensorCore capacity)
    budget = phys - max(phys // 8, 8 << 20)   # >= 8 MiB / ~12.5% headroom
    return int(min(max(budget, 16 << 20), 100 << 20))


# ----------------------------------------------------------------------------
# Pass 1: logits tile + online log-sum-exp across V tiles.
# ----------------------------------------------------------------------------

def _online_lse_update(logits, logits_ref, lse_ref, m_ref, l_ref, is_last_v):
    logits_ref[...] = logits
    tile_max = jnp.max(logits, axis=-1, keepdims=True)
    m_new = jnp.maximum(m_ref[...], tile_max)
    alpha = jnp.exp(m_ref[...] - m_new)
    l_ref[...] = alpha * l_ref[...] + jnp.sum(
        jnp.exp(logits - m_new), axis=-1, keepdims=True)
    m_ref[...] = m_new

    @pl.when(is_last_v)
    def _emit_lse():
        lse_ref[...] = m_ref[...] + jnp.log(l_ref[...])


def _pass1_kernel_noacc(x_ref, w_ref, b_ref, logits_ref, lse_ref, m_ref, l_ref):
    # grid = (i, v); d_model fits in a single K block -> no accumulator scratch.
    v = pl.program_id(1)
    nv = pl.num_programs(1)

    @pl.when(v == 0)
    def _init():
        m_ref[...] = jnp.full_like(m_ref, -jnp.inf)
        l_ref[...] = jnp.zeros_like(l_ref)

    logits = jnp.dot(x_ref[...], w_ref[...],
                     preferred_element_type=jnp.float32)
    logits = logits + b_ref[...].astype(jnp.float32)
    _online_lse_update(logits, logits_ref, lse_ref, m_ref, l_ref, v == nv - 1)


def _pass1_kernel_acc(x_ref, w_ref, b_ref, logits_ref, lse_ref,
                      m_ref, l_ref, acc_ref):
    # grid = (i, v, k); f32 accumulator across the K (d_model) axis.
    v = pl.program_id(1)
    k = pl.program_id(2)
    nv = pl.num_programs(1)
    nk = pl.num_programs(2)

    @pl.when((v == 0) & (k == 0))
    def _init_lse():
        m_ref[...] = jnp.full_like(m_ref, -jnp.inf)
        l_ref[...] = jnp.zeros_like(l_ref)

    @pl.when(k == 0)
    def _init_acc():
        acc_ref[...] = jnp.zeros_like(acc_ref)

    acc_ref[...] += jnp.dot(x_ref[...], w_ref[...],
                            preferred_element_type=jnp.float32)

    @pl.when(k == nk - 1)
    def _emit_tile():
        logits = acc_ref[...] + b_ref[...].astype(jnp.float32)
        _online_lse_update(logits, logits_ref, lse_ref, m_ref, l_ref,
                           v == nv - 1)


# ----------------------------------------------------------------------------
# Pass 2: out = logits - lse (elementwise, lane-dense stores).
# ----------------------------------------------------------------------------

def _normalize_kernel(logits_ref, lse_ref, o_ref):
    o_ref[...] = (logits_ref[...] - lse_ref[...]).astype(o_ref.dtype)


# ----------------------------------------------------------------------------
# Wrapper
# ----------------------------------------------------------------------------

def generator_forward(x, weight, bias, *, tm=None, tk=None, tv=None,
                      compute_dtype=None):
    """log_softmax(x @ weight + bias, axis=-1).

    x:      (batch, seq, d_model)
    weight: (d_model, vocab)   (transposed nn.Linear weight)
    bias:   (vocab,)
    compute_dtype: e.g. jnp.bfloat16 for the fast MXU path.  For repeated
        forwards, pre-cast the weight to compute_dtype once at load time so no
        per-call cast is paid; accumulation / LSE always run in f32.
    """
    batch, seq, d_model = x.shape
    dw, vocab = weight.shape
    assert dw == d_model, "weight must be (d_model, vocab)"
    out_dtype = x.dtype
    M = batch * seq

    cd = jnp.dtype(compute_dtype) if compute_dtype is not None else jnp.dtype(x.dtype)
    x_item = cd.itemsize
    w_item = cd.itemsize if compute_dtype is not None else jnp.dtype(weight.dtype).itemsize
    o_item = jnp.dtype(out_dtype).itemsize
    # Sub-32-bit dtypes pack 2x/4x rows per sublane -> larger row alignment.
    row_align = 8 * max(1, 4 // max(x_item, 1))

    # ---- vocab (lane) tiling --------------------------------------------------
    if tv is None:
        tv = min(2048, _round_up(vocab, 128))
    else:
        tv = _round_up(tv, 128)
    tv = min(tv, _round_up(vocab, 128))
    v_pad = _round_up(vocab, tv)
    num_v = v_pad // tv

    # ---- d_model (K) tiling ---------------------------------------------------
    if tk is None:
        tk = d_model if d_model <= 1024 else 512
    if tk >= d_model:
        tk, d_pad = d_model, d_model          # single K step, full-D blocks
    else:
        tk = _round_up(tk, 128)               # partial blocks must be lane-divisible
        d_pad = _round_up(d_model, tk)
    num_k = d_pad // tk

    # ---- row (M) tiling from the per-chip VMEM budget --------------------------
    budget = _vmem_budget_bytes()
    m_rows = _round_up(M, row_align)
    w_bufs = 1 if (num_k == 1 and num_v == 1) else 2
    b_bufs = 1 if num_v == 1 else 2
    fixed = w_bufs * tk * tv * w_item + b_bufs * tv * 4
    per_row = (2 * tk * x_item          # x tile, double-buffered
               + 2 * tv * 4             # f32 logits out tile, double-buffered
               + 16                     # lse out tile + m/l scratch
               + (tv * 4 if num_k > 1 else 0))   # f32 accumulator
    tm_budget = max(row_align, int((budget - fixed) // per_row))
    if tm is None:
        tm = min(1024, tm_budget)       # bigger tm => fewer weight re-streams
        # Prefer >= 2 row tiles so the "parallel" axis can shard across both
        # TensorCores on v7x; no-op when M is tiny.
        if m_rows >= 2 * row_align:
            tm = min(tm, (m_rows // (2 * row_align)) * row_align)
    tm = _round_down(min(tm, m_rows, tm_budget), row_align)
    m_pad = _round_up(M, tm)
    num_i = m_pad // tm

    # ---- operand preparation (cast / flatten / pad) -----------------------------
    x2 = x.reshape(M, d_model)
    if compute_dtype is not None and x2.dtype != cd:
        x2 = x2.astype(cd)
    w2 = weight
    if compute_dtype is not None and w2.dtype != cd:
        # NOTE: pre-cast the weight once at parameter-load time to avoid this
        # per-call D*V HBM round trip.
        w2 = w2.astype(cd)
    if m_pad != M or d_pad != d_model:
        x2 = jnp.pad(x2, ((0, m_pad - M), (0, d_pad - d_model)))
    if d_pad != d_model or v_pad != vocab:
        w2 = jnp.pad(w2, ((0, d_pad - d_model), (0, v_pad - vocab)))
    b2 = bias.astype(jnp.float32).reshape(1, vocab)
    if v_pad != vocab:
        # Padded vocab columns get a huge negative bias so they never win the
        # max and contribute exp()==0 to the log-sum-exp.
        b2 = jnp.pad(b2, ((0, 0), (0, v_pad - vocab)), constant_values=NEG_BIG)

    x_item_b = jnp.dtype(x2.dtype).itemsize
    w_item_b = jnp.dtype(w2.dtype).itemsize

    # ---- pass 1: logits + LSE ----------------------------------------------------
    cost1 = pl.CostEstimate(
        flops=2 * m_pad * d_pad * v_pad,
        transcendentals=m_pad * (v_pad + num_v),
        bytes_accessed=(num_v * m_pad * d_pad * x_item_b
                        + num_i * d_pad * v_pad * w_item_b      # weight re-streamed per row tile
                        + v_pad * 4
                        + m_pad * v_pad * 4 + m_pad * 4),
    )

    scratch = [pltpu.VMEM((tm, 1), jnp.float32),   # running max
               pltpu.VMEM((tm, 1), jnp.float32)]   # running sum

    if num_k == 1:
        grid1 = (num_i, num_v)
        sem1 = ("parallel", "arbitrary")
        kernel1 = _pass1_kernel_noacc
        x_spec = pl.BlockSpec((tm, tk), lambda i, v: (i, 0))
        w_map = lambda i, v: (0, v)
        b_map = lambda i, v: (0, v)
        logits_spec = pl.BlockSpec((tm, tv), lambda i, v: (i, v))
        lse_spec = pl.BlockSpec((tm, 1), lambda i, v: (i, 0))
    else:
        grid1 = (num_i, num_v, num_k)
        sem1 = ("parallel", "arbitrary", "arbitrary")
        kernel1 = _pass1_kernel_acc
        scratch = scratch + [pltpu.VMEM((tm, tv), jnp.float32)]
        x_spec = pl.BlockSpec((tm, tk), lambda i, v, k: (i, k))
        w_map = lambda i, v, k: (k, v)
        b_map = lambda i, v, k: (0, v)
        logits_spec = pl.BlockSpec((tm, tv), lambda i, v, k: (i, v))
        lse_spec = pl.BlockSpec((tm, 1), lambda i, v, k: (i, 0))

    w_spec = (_single_buffered_spec((tk, tv), w_map)
              if (num_k == 1 and num_v == 1) else pl.BlockSpec((tk, tv), w_map))
    b_spec = (_single_buffered_spec((1, tv), b_map)
              if num_v == 1 else pl.BlockSpec((1, tv), b_map))

    logits, lse = pl.pallas_call(
        kernel1,
        out_shape=(jax.ShapeDtypeStruct((m_pad, v_pad), jnp.float32),
                   jax.ShapeDtypeStruct((m_pad, 1), jnp.float32)),
        grid_spec=pltpu.PrefetchScalarGridSpec(
            num_scalar_prefetch=0,
            grid=grid1,
            in_specs=[x_spec, w_spec, b_spec],
            out_specs=[logits_spec, lse_spec],
            scratch_shapes=scratch,
        ),
        compiler_params=pltpu.CompilerParams(
            dimension_semantics=sem1,
            vmem_limit_bytes=budget,
        ),
        cost_estimate=cost1,
    )(x2, w2, b2)

    # ---- pass 2: out = logits - lse -----------------------------------------------
    cost2 = pl.CostEstimate(
        flops=m_pad * v_pad,
        transcendentals=0,
        bytes_accessed=m_pad * v_pad * 4 + m_pad * 4 + m_pad * v_pad * o_item,
    )
    out = pl.pallas_call(
        _normalize_kernel,
        out_shape=jax.ShapeDtypeStruct((m_pad, v_pad), out_dtype),
        grid_spec=pltpu.PrefetchScalarGridSpec(
            num_scalar_prefetch=0,
            grid=(num_i, num_v),
            in_specs=[pl.BlockSpec((tm, tv), lambda i, v: (i, v)),
                      pl.BlockSpec((tm, 1), lambda i, v: (i, 0))],
            out_specs=pl.BlockSpec((tm, tv), lambda i, v: (i, v)),
        ),
        compiler_params=pltpu.CompilerParams(
            dimension_semantics=("parallel", "parallel"),
            vmem_limit_bytes=budget,
        ),
        cost_estimate=cost2,
    )(logits, lse)

    return out[:M, :vocab].reshape(batch, seq, vocab)


def _reference(x, weight, bias):
    logits = jnp.einsum("bsd,dv->bsv", x.astype(jnp.float32),
                        weight.astype(jnp.float32)) + bias.astype(jnp.float32)
    return jax.nn.log_softmax(logits, axis=-1)


if __name__ == "__main__":
    # Small shapes consistent with the module: d_model=32, vocab=128, batch=2, seq=8.
    batch, seq, d_model, vocab = 2, 8, 32, 128

    key = jax.random.PRNGKey(0)
    kx, kw, kb = jax.random.split(key, 3)
    x = jax.random.normal(kx, (batch, seq, d_model), dtype=jnp.float32)
    # Deterministic init mimicking nn.Linear's uniform(-1/sqrt(d), 1/sqrt(d)).
    bound = 1.0 / math.sqrt(d_model)
    weight = jax.random.uniform(kw, (d_model, vocab), jnp.float32, -bound, bound)
    bias = jax.random.uniform(kb, (vocab,), jnp.float32, -bound, bound)

    ref = _reference(x, weight, bias)

    # 1) f32 path (single K block, single V tile).
    out = jax.block_until_ready(generator_forward(x, weight, bias))
    assert out.shape == (batch, seq, vocab)
    assert jnp.allclose(out, ref, atol=1e-5, rtol=1e-5), "f32 kernel mismatch"

    # 2) bf16 MXU path: weight pre-cast once (no per-call cast of the weight).
    weight_bf16 = weight.astype(jnp.bfloat16)
    out_bf16 = jax.block_until_ready(
        generator_forward(x, weight_bf16, bias, compute_dtype=jnp.bfloat16))
    assert out_bf16.shape == (batch, seq, vocab)
    assert jnp.allclose(out_bf16, ref, atol=5e-2, rtol=5e-2), "bf16 kernel mismatch"

    # 3) V-tiled online-LSE path with non-128-multiple vocab (pad columns masked
    #    via NEG_BIG bias), single K block.
    v3 = 200
    k3 = jax.random.PRNGKey(2)
    kw3, kb3 = jax.random.split(k3, 2)
    w3 = jax.random.uniform(kw3, (d_model, v3), jnp.float32, -bound, bound)
    b3 = jax.random.uniform(kb3, (v3,), jnp.float32, -bound, bound)
    out3 = jax.block_until_ready(generator_forward(x, w3, b3, tv=128))
    ref3 = _reference(x, w3, b3)
    assert out3.shape == (batch, seq, v3)
    assert jnp.allclose(out3, ref3, atol=1e-5, rtol=1e-5), "V-tiled kernel mismatch"

    # 4) Fully general path: M not a tile multiple, K-tiled d_model with zero pad,
    #    f32 accumulator across K, V tiled with vocab padding.
    b4_, s4_, d4_, v4_ = 3, 5, 320, 200
    k4 = jax.random.PRNGKey(1)
    kx4, kw4, kb4 = jax.random.split(k4, 3)
    x4 = jax.random.normal(kx4, (b4_, s4_, d4_), dtype=jnp.float32)
    bound4 = 1.0 / math.sqrt(d4_)
    w4 = jax.random.uniform(kw4, (d4_, v4_), jnp.float32, -bound4, bound4)
    b4 = jax.random.uniform(kb4, (v4_,), jnp.float32, -bound4, bound4)
    out4 = jax.block_until_ready(generator_forward(x4, w4, b4, tk=128, tv=128))
    ref4 = _reference(x4, w4, b4)
    assert out4.shape == (b4_, s4_, v4_)
    assert jnp.allclose(out4, ref4, atol=1e-4, rtol=1e-4), "K/V-tiled kernel mismatch"

    print("KERNEL_OK")
</pallas_src>

<mosaic_0001>
module attributes {stable_mosaic.version = 11 : i64} {
  func.func @_pass1_kernel_noacc(%arg0: i32, %arg1: i32, %arg2: memref<8x32xf32, #tpu.memory_space<vmem>>, %arg3: memref<32x128xf32, #tpu.memory_space<vmem>>, %arg4: memref<1x128xf32, #tpu.memory_space<vmem>>, %arg5: memref<8x128xf32, #tpu.memory_space<vmem>>, %arg6: memref<8x1xf32, #tpu.memory_space<vmem>>, %arg7: memref<8x1xf32, #tpu.memory_space<vmem>>, %arg8: memref<8x1xf32, #tpu.memory_space<vmem>>) attributes {dimension_semantics = [#tpu.dimension_semantics<parallel>, #tpu.dimension_semantics<arbitrary>], iteration_bounds = array<i64: 2, 1>, scalar_prefetch = 0 : i64, scratch_operands = 2 : i64, tpu.core_type = #tpu.core_type<tc>, window_params = [{transform_indices = @transform_0, window_bounds = array<i64: 8, 32>}, {pipeline_mode = #tpu.pipeline_mode<synchronous>, transform_indices = @transform_1, window_bounds = array<i64: 32, 128>}, {pipeline_mode = #tpu.pipeline_mode<synchronous>, transform_indices = @transform_2, window_bounds = array<i64: 1, 128>}, {transform_indices = @transform_3, window_bounds = array<i64: 8, 128>}, {transform_indices = @transform_4, window_bounds = array<i64: 8, 1>}]} {
    %c0_i32 = arith.constant 0 : i32
    %0 = arith.cmpi eq, %arg1, %c0_i32 : i32
    %1 = arith.extui %0 : i1 to i32
    %c0_i32_0 = arith.constant 0 : i32
    %2 = arith.cmpi ne, %1, %c0_i32_0 : i32
    scf.if %2 {
      %cst_22 = arith.constant 0xFF800000 : f32
      %30 = vector.broadcast %cst_22 : f32 to vector<8x1xf32>
      %c0_23 = arith.constant 0 : index
      %c0_24 = arith.constant 0 : index
      %31 = vector.load %arg7[%c0_23, %c0_24] : memref<8x1xf32, #tpu.memory_space<vmem>>, vector<8x1xf32>
      tpu.vector_store %arg7[%c0_23, %c0_24], %30 {strides = array<i32>} : memref<8x1xf32, #tpu.memory_space<vmem>>, vector<8x1xf32>,
      %cst_25 = arith.constant 0.000000e+00 : f32
      %32 = vector.broadcast %cst_25 : f32 to vector<8x1xf32>
      %c0_26 = arith.constant 0 : index
      %c0_27 = arith.constant 0 : index
      %33 = vector.load %arg8[%c0_26, %c0_27] : memref<8x1xf32, #tpu.memory_space<vmem>>, vector<8x1xf32>
      tpu.vector_store %arg8[%c0_26, %c0_27], %32 {strides = array<i32>} : memref<8x1xf32, #tpu.memory_space<vmem>>, vector<8x1xf32>,
    } else {
    }
    %c0 = arith.constant 0 : index
    %c0_1 = arith.constant 0 : index
    %3 = vector.load %arg2[%c0, %c0_1] : memref<8x32xf32, #tpu.memory_space<vmem>>, vector<8x32xf32>
    %c0_2 = arith.constant 0 : index
    %c0_3 = arith.constant 0 : index
    %4 = vector.load %arg3[%c0_2, %c0_3] : memref<32x128xf32, #tpu.memory_space<vmem>>, vector<32x128xf32>
    %cst = arith.constant dense<0.000000e+00> : vector<8x128xf32>
    %5 = tpu.matmul %3, %4, %cst {dimension_numbers = #tpu.dot_dimension_numbers<[1], [0], [0], [1], [0, 0, 1, 1], [], []>} : vector<8x32xf32>, vector<32x128xf32>, vector<8x128xf32> -> vector<8x128xf32>
    %c0_4 = arith.constant 0 : index
    %c0_5 = arith.constant 0 : index
    %6 = vector.load %arg4[%c0_4, %c0_5] : memref<1x128xf32, #tpu.memory_space<vmem>>, vector<1x128xf32>
    %7 = vector.broadcast %6 : vector<1x128xf32> to vector<8x128xf32>
    %8 = arith.addf %5, %7 : vector<8x128xf32>
    %c0_i32_6 = arith.constant 0 : i32
    %9 = arith.cmpi eq, %arg1, %c0_i32_6 : i32
    %c0_7 = arith.constant 0 : index
    %c0_8 = arith.constant 0 : index
    %10 = vector.load %arg5[%c0_7, %c0_8] : memref<8x128xf32, #tpu.memory_space<vmem>>, vector<8x128xf32>
    tpu.vector_store %arg5[%c0_7, %c0_8], %8 {strides = array<i32>} : memref<8x128xf32, #tpu.memory_space<vmem>>, vector<8x128xf32>,
    %cst_9 = arith.constant dense<0xFF800000> : vector<8xf32>
    %11 = vector.multi_reduction <maximumf>, %8, %cst_9 [1] : vector<8x128xf32> to vector<8xf32>
    %12 = vector.shape_cast %11 : vector<8xf32> to vector<8x1xf32>
    %c0_10 = arith.constant 0 : index
    %c0_11 = arith.constant 0 : index
    %13 = vector.load %arg7[%c0_10, %c0_11] : memref<8x1xf32, #tpu.memory_space<vmem>>, vector<8x1xf32>
    %14 = arith.maximumf %13, %12 : vector<8x1xf32>
    %c0_12 = arith.constant 0 : index
    %c0_13 = arith.constant 0 : index
    %15 = vector.load %arg7[%c0_12, %c0_13] : memref<8x1xf32, #tpu.memory_space<vmem>>, vector<8x1xf32>
    %16 = arith.subf %15, %14 : vector<8x1xf32>
    %17 = math.exp %16 : vector<8x1xf32>
    %c0_14 = arith.constant 0 : index
    %c0_15 = arith.constant 0 : index
    %18 = vector.load %arg8[%c0_14, %c0_15] : memref<8x1xf32, #tpu.memory_space<vmem>>, vector<8x1xf32>
    %19 = arith.mulf %17, %18 : vector<8x1xf32>
    %20 = vector.broadcast %14 : vector<8x1xf32> to vector<8x128xf32>
    %21 = arith.subf %8, %20 : vector<8x128xf32>
    %22 = math.exp %21 : vector<8x128xf32>
    %cst_16 = arith.constant dense<0.000000e+00> : vector<8xf32>
    %23 = vector.multi_reduction <add>, %22, %cst_16 [1] : vector<8x128xf32> to vector<8xf32>
    %24 = vector.shape_cast %23 : vector<8xf32> to vector<8x1xf32>
    %25 = arith.addf %19, %24 : vector<8x1xf32>
    %c0_17 = arith.constant 0 : index
    %c0_18 = arith.constant 0 : index
    %26 = vector.load %arg8[%c0_17, %c0_18] : memref<8x1xf32, #tpu.memory_space<vmem>>, vector<8x1xf32>
    tpu.vector_store %arg8[%c0_17, %c0_18], %25 {strides = array<i32>} : memref<8x1xf32, #tpu.memory_space<vmem>>, vector<8x1xf32>,
    %c0_19 = arith.constant 0 : index
    %c0_20 = arith.constant 0 : index
    %27 = vector.load %arg7[%c0_19, %c0_20] : memref<8x1xf32, #tpu.memory_space<vmem>>, vector<8x1xf32>
    tpu.vector_store %arg7[%c0_19, %c0_20], %14 {strides = array<i32>} : memref<8x1xf32, #tpu.memory_space<vmem>>, vector<8x1xf32>,
    %28 = arith.extui %9 : i1 to i32
    %c0_i32_21 = arith.constant 0 : i32
    %29 = arith.cmpi ne, %28, %c0_i32_21 : i32
    scf.if %29 {
      %c0_22 = arith.constant 0 : index
      %c0_23 = arith.constant 0 : index
      %30 = vector.load %arg7[%c0_22, %c0_23] : memref<8x1xf32, #tpu.memory_space<vmem>>, vector<8x1xf32>
      %c0_24 = arith.constant 0 : index
      %c0_25 = arith.constant 0 : index
      %31 = vector.load %arg8[%c0_24, %c0_25] : memref<8x1xf32, #tpu.memory_space<vmem>>, vector<8x1xf32>
      %32 = math.log %31 : vector<8x1xf32>
      %33 = arith.addf %30, %32 : vector<8x1xf32>
      %c0_26 = arith.constant 0 : index
      %c0_27 = arith.constant 0 : index
      %34 = vector.load %arg6[%c0_26, %c0_27] : memref<8x1xf32, #tpu.memory_space<vmem>>, vector<8x1xf32>
      tpu.vector_store %arg6[%c0_26, %c0_27], %33 {strides = array<i32>} : memref<8x1xf32, #tpu.memory_space<vmem>>, vector<8x1xf32>,
    } else {
    }
    return
  }
  func.func @transform_0(%arg0: i32, %arg1: i32) -> (i32, i32) {
    %c0_i32 = arith.constant 0 : i32
    %c0_i32_0 = arith.constant 0 : i32
    return %arg0, %c0_i32 : i32, i32
  }
  func.func @transform_1(%arg0: i32, %arg1: i32) -> (i32, i32) {
    %c0_i32 = arith.constant 0 : i32
    %c0_i32_0 = arith.constant 0 : i32
    return %c0_i32, %arg1 : i32, i32
  }
  func.func @transform_2(%arg0: i32, %arg1: i32) -> (i32, i32) {
    %c0_i32 = arith.constant 0 : i32
    %c0_i32_0 = arith.constant 0 : i32
    return %c0_i32, %arg1 : i32, i32
  }
  func.func @transform_3(%arg0: i32, %arg1: i32) -> (i32, i32) {
    %c0_i32 = arith.constant 0 : i32
    return %arg0, %arg1 : i32, i32
  }
  func.func @transform_4(%arg0: i32, %arg1: i32) -> (i32, i32) {
    %c0_i32 = arith.constant 0 : i32
    %c0_i32_0 = arith.constant 0 : i32
    return %arg0, %c0_i32 : i32, i32
  }
}

</mosaic_0001>

<llo_original>
// kernel: tpu_custom_call.1
$region0: #{tpu_custom_call.1}
  #allocation0 [shape = 'u32[]', space=smem, size = 0x4, offset = 0x4, fixed_abs, tag = 'smem constant byte address 0x4 - core index']
  #allocation1 [shape = 'u32[72,128]{1,0:T(1,128)}', space=vmem, size = 0x9000, scoped, tag = 'internal scratch']
  #allocation2 [shape = 'f32[8,1]{1,0:T(8,128)}', space=vmem, size = 0x1000, scoped, tag = 'scratch operand']
  #allocation3 [shape = 'f32[8,1]{1,0:T(8,128)}', space=vmem, size = 0x1000, scoped, tag = 'scratch operand']
  %s0 = inlined_call_operand.hbm [shape: f32[16,32], index: 0, kind: input, shape index: {}]
  %s1 = inlined_call_operand.hbm [shape: f32[32,128], index: 1, kind: input, shape index: {}]
  %s2 = inlined_call_operand.vmem [shape: f32[1,128], index: 2, kind: input, shape index: {}]
  %s3 = inlined_call_operand.hbm [shape: f32[16,128], index: 3, kind: output, shape index: {0}]
  %s4 = inlined_call_operand.vmem [shape: f32[16,1], index: 4, kind: output, shape index: {1}]
  %5 = xla_tuple %s3, %s4
  %s6 = sld [smem:[#allocation0]]
  $region69: #{tpu_custom_call.1} parent=0
    _
  %s8 = ssub.s32 1, %s6
  %s9 = scalar_select 0, %s8, %s6
  $region1: #{tpu_custom_call.1} parent=0
    #allocation4 [shape = 'u8[8192]{0}', space=vmem, size = 0x2000, scoped, tag = 'input window, operand 0']
    #allocation5 [shape = 's32[2]{0}', space=sflag, size = 0x8, scoped, tag = 'scoped memory for tpu_custom_call.1']
    #allocation6 [shape = 's32[2]{0}', space=sflag, size = 0x8, scoped, tag = 'scoped memory for tpu_custom_call.1']
    #allocation7 [shape = 'u8[16384]{0}', space=vmem, size = 0x4000, scoped, tag = 'input window, operand 1, single buffered']
    #allocation8 [shape = 's32[1]{0}', space=sflag, size = 0x4, scoped, tag = 'scoped memory for tpu_custom_call.1']
    #allocation9 [shape = 'u8[8192]{0}', space=vmem, size = 0x2000, scoped, tag = 'output window, operand 0']
    %10 = vsyncpa [#allocation5], 0
    %s11 = scalar_lea.sflag [#allocation5], 1
    %12 = vsyncpa %s11, 0
    %13 = vsyncpa [#allocation8], 0
    %14 = vsyncpa [#allocation6], 0
    %s15 = scalar_lea.sflag [#allocation6], 1
    %16 = vsyncpa %s15, 0
    loop: start=0, step=1, limit=4
    $region2: #{tpu_custom_call.1} parent=1 // loop_pre_header
      _
    $region3: #{tpu_custom_call.1} parent=1 // loop_header
      %s18 = sphi 0, %s22
      %p19 = scmp.ge.s32.totalorder %s18, 4
      %s25 = sphi 0, %s37
      %s26 = sphi 0, %s33
      %s27 = sphi 0, %s25
      %s28 = sphi 0, %s26
      %s29 = sphi 0, %s27
      %s30 = sphi 0, %s28
      %s40 = sphi 0, %s42
      %s43 = sphi 0, %s40
      %s44 = sphi 0, %s43
      %s60 = sphi 0, %s44
      %s66 = sphi 0, %s68
      %s69 = sphi 0, %s66
      %s70 = sphi 0, %s69
      %s86 = sphi 0, %s70
      %s92 = sphi 0, %s94
      %s95 = sphi 0, %s92
      %s96 = sphi 0, %s95
      %s112 = sphi 0, %s96
      %s120 = sphi 0, %s122
      %s123 = sphi 0, %s120
      %s124 = sphi 0, %s123
      %s140 = sphi 0, %s124
      %s146 = sphi 0, %s148
      %s149 = sphi 0, %s146
      %s150 = sphi 0, %s149
      %s166 = sphi 0, %s150
    $region4: #{tpu_custom_call.1} parent=1 // loop_header_branch
      %21 = sbr.rel (%p19) target = $region8
    $region5: #{tpu_custom_call.1} parent=1 // loop_body
      %s23 = ssub.s32 %s18, 1
      %s24 = ssub.s32 %s18, 2
      %s31 = sadd.s32 1, %s26
      %p32 = scmp.ge.s32.totalorder %s31, 1
      %s33 = scalar_select %p32, 0, %s31
      %s34 = sadd.s32 1, %s25
      %s35 = scalar_select %p32, %s34, %s25
      %p36 = scmp.ge.s32.totalorder %s35, 2
      %s37 = scalar_select %p36, 0, %s35
      %s38 = ssub.s32 %s25, %s37
      %p39 = scmp.eq.s32.totalorder %s38, 0
      %s41 = sadd.s32 %s40, 1
      %s42 = scalar_select %p39, %s40, %s41
      %p45 = pneg %p39
      %p46 = scmp.eq.s32.totalorder %s18, 1
      %p47 = por %p45, %p46
      %p48 = scmp.ne.s32.totalorder %s40, %s43
      %p49 = scmp.eq.s32.totalorder %s18, 0
      %p50 = por %p48, %p49
      %p51 = scmp.ne.s32.totalorder %s40, %s43
      %p52 = scmp.eq.s32.totalorder %s23, 1
      %p53 = por %p51, %p52
      %p54 = scmp.ne.s32.totalorder %s43, %s44
      %p55 = scmp.eq.s32.totalorder %s23, 0
      %p56 = por %p54, %p55
      %p57 = scmp.ne.s32.totalorder %s43, %s44
      %p58 = scmp.eq.s32.totalorder %s24, 1
      %p59 = por %p57, %p58
      %p61 = scmp.ne.s32.totalorder %s44, %s60
      %p62 = scmp.eq.s32.totalorder %s24, 0
      %p63 = por %p61, %p62
      %s64 = ssub.s32 %s26, %s33
      %p65 = scmp.eq.s32.totalorder %s64, 0
      %s67 = sadd.s32 %s66, 1
      %s68 = scalar_select %p65, %s66, %s67
      %p71 = pneg %p65
      %p72 = scmp.eq.s32.totalorder %s18, 1
      %p73 = por %p71, %p72
      %p74 = scmp.ne.s32.totalorder %s66, %s69
      %p75 = scmp.eq.s32.totalorder %s18, 0
      %p76 = por %p74, %p75
      %p77 = scmp.ne.s32.totalorder %s66, %s69
      %p78 = scmp.eq.s32.totalorder %s23, 1
      %p79 = por %p77, %p78
      %p80 = scmp.ne.s32.totalorder %s69, %s70
      %p81 = scmp.eq.s32.totalorder %s23, 0
      %p82 = por %p80, %p81
      %p83 = scmp.ne.s32.totalorder %s69, %s70
      %p84 = scmp.eq.s32.totalorder %s24, 1
      %p85 = por %p83, %p84
      %p87 = scmp.ne.s32.totalorder %s70, %s86
      %p88 = scmp.eq.s32.totalorder %s24, 0
      %p89 = por %p87, %p88
      %s90 = ssub.s32 %s26, %s33
      %p91 = scmp.eq.s32.totalorder %s90, 0
      %s93 = sadd.s32 %s92, 1
      %s94 = scalar_select %p91, %s92, %s93
      %p97 = pneg %p91
      %p98 = scmp.eq.s32.totalorder %s18, 1
      %p99 = por %p97, %p98
      %p100 = scmp.ne.s32.totalorder %s92, %s95
      %p101 = scmp.eq.s32.totalorder %s18, 0
      %p102 = por %p100, %p101
      %p103 = scmp.ne.s32.totalorder %s92, %s95
      %p104 = scmp.eq.s32.totalorder %s23, 1
      %p105 = por %p103, %p104
      %p106 = scmp.ne.s32.totalorder %s95, %s96
      %p107 = scmp.eq.s32.totalorder %s23, 0
      %p108 = por %p106, %p107
      %p109 = scmp.ne.s32.totalorder %s95, %s96
      %p110 = scmp.eq.s32.totalorder %s24, 1
      %p111 = por %p109, %p110
      %p113 = scmp.ne.s32.totalorder %s96, %s112
      %p114 = scmp.eq.s32.totalorder %s24, 0
      %p115 = por %p113, %p114
      %s116 = ssub.s32 %s25, %s37
      %s117 = ssub.s32 %s26, %s33
      %s118 = sor.u32 %s116, %s117
      %p119 = scmp.eq.s32.totalorder %s118, 0
      %s121 = sadd.s32 %s120, 1
      %s122 = scalar_select %p119, %s120, %s121
      %p125 = pneg %p119
      %p126 = scmp.eq.s32.totalorder %s18, 1
      %p127 = por %p125, %p126
      %p128 = scmp.ne.s32.totalorder %s120, %s123
      %p129 = scmp.eq.s32.totalorder %s18, 0
      %p130 = por %p128, %p129
      %p131 = scmp.ne.s32.totalorder %s120, %s123
      %p132 = scmp.eq.s32.totalorder %s23, 1
      %p133 = por %p131, %p132
      %p134 = scmp.ne.s32.totalorder %s123, %s124
      %p135 = scmp.eq.s32.totalorder %s23, 0
      %p136 = por %p134, %p135
      %p137 = scmp.ne.s32.totalorder %s123, %s124
      %p138 = scmp.eq.s32.totalorder %s24, 1
      %p139 = por %p137, %p138
      %p141 = scmp.ne.s32.totalorder %s124, %s140
      %p142 = scmp.eq.s32.totalorder %s24, 0
      %p143 = por %p141, %p142
      %s144 = ssub.s32 %s25, %s37
      %p145 = scmp.eq.s32.totalorder %s144, 0
      %s147 = sadd.s32 %s146, 1
      %s148 = scalar_select %p145, %s146, %s147
      %p151 = pneg %p145
      %p152 = scmp.eq.s32.totalorder %s18, 1
      %p153 = por %p151, %p152
      %p154 = scmp.ne.s32.totalorder %s146, %s149
      %p155 = scmp.eq.s32.totalorder %s18, 0
      %p156 = por %p154, %p155
      %p157 = scmp.ne.s32.totalorder %s146, %s149
      %p158 = scmp.eq.s32.totalorder %s23, 1
      %p159 = por %p157, %p158
      %p160 = scmp.ne.s32.totalorder %s149, %s150
      %p161 = scmp.eq.s32.totalorder %s23, 0
      %p162 = por %p160, %p161
      %p163 = scmp.ne.s32.totalorder %s149, %s150
      %p164 = scmp.eq.s32.totalorder %s24, 1
      %p165 = por %p163, %p164
      %p167 = scmp.ne.s32.totalorder %s150, %s166
      %p168 = scmp.eq.s32.totalorder %s24, 0
      %p169 = por %p167, %p168
      %p170 = scmp.le.s32.totalorder 1, %s18
      %p171 = scmp.lt.s32.totalorder %s18, 3
      %p172 = pnand %p170, %p171
      %p173 = pneg %p172
      // Predicated region
      $region9: #{tpu_custom_call.1} parent=5 // pred_check
        _
      $region10: #{tpu_custom_call.1} parent=5 // pred_check_branch
        %175 = sbr.rel (%p172) target = $region12
      $region11: #{tpu_custom_call.1} parent=5 // pred_region
        %s176 = ssub.s32 %s18, 1
        // Predicated region
        $region13: #{tpu_custom_call.1} parent=11 // pred_check
          %p177 = pneg %p82
        $region14: #{tpu_custom_call.1} parent=11 // pred_check_branch
          %179 = sbr.rel (%p177) target = $region16
        $region15: #{tpu_custom_call.1} parent=11 // pred_region
          %181 = vsyncadd [#allocation8], 0
          %s182 = smul.addr %s28, 8
          %s183 = scalar_lea.hbm %s1, %s182
          %s184 = sshll.u32 %s183, 4
          %s185 = int_to_ptr.hbm [resolvable:$true] %s184
          %s186 = sshll.u32 [#allocation7], 4
          %s187 = int_to_ptr.vmem [resolvable:$true] %s186
          %192 = dma.hbm_to_vmem [thread:$0]  %s185, 512, %s187, [#allocation8], 128, 128, 8
        $region16: #{tpu_custom_call.1} parent=11 // pred_fallthru
          _
        // Predicated region
        $region17: #{tpu_custom_call.1} parent=11 // pred_check
          %p193 = pneg %p108
        $region18: #{tpu_custom_call.1} parent=11 // pred_check_branch
          %195 = sbr.rel (%p193) target = $region20
        $region19: #{tpu_custom_call.1} parent=11 // pred_region
          %p196 = scmp.lt.s32.totalorder %s28, 0
          %s197 = scalar_select %p196, %s28, 0
          %s198 = scalar_lea.vmem %s2, %s197
        $region20: #{tpu_custom_call.1} parent=11 // pred_fallthru
          _
      $region12: #{tpu_custom_call.1} parent=5 // pred_fallthru
        _
      %p199 = scmp.lt.s32.totalorder %s18, 2
      // Predicated region
      $region21: #{tpu_custom_call.1} parent=5 // pred_check
        %p200 = pneg %p199
      $region22: #{tpu_custom_call.1} parent=5 // pred_check_branch
        %202 = sbr.rel (%p200) target = $region24
      $region23: #{tpu_custom_call.1} parent=5 // pred_region
        // Predicated region
        $region25: #{tpu_custom_call.1} parent=23 // pred_check
          %p203 = pneg %p50
        $region26: #{tpu_custom_call.1} parent=23 // pred_check_branch
          %205 = sbr.rel (%p203) target = $region28
        $region27: #{tpu_custom_call.1} parent=23 // pred_region
          %s206 = sand.u32 %s40, 1
          %s207 = scalar_lea.sflag [#allocation5], %s206
          %s208 = sand.u32 %s40, 1
          %s209 = smul.addr %s208, 8
          %s210 = scalar_lea.vmem [#allocation4], %s209
          %212 = vsyncadd %s207, 0
          %s213 = smul.addr %s25, 8
          %s214 = scalar_lea.hbm %s0, %s213
          %s216 = sshll.u32 %s214, 4
          %s217 = int_to_ptr.hbm [resolvable:$true] %s216
          %s218 = sshll.u32 %s210, 4
          %s219 = int_to_ptr.vmem [resolvable:$true] %s218
          %221 = dma.hbm_to_vmem [thread:$0]  %s217, 128, %s219, %s207
        $region28: #{tpu_custom_call.1} parent=23 // pred_fallthru
          _
      $region24: #{tpu_custom_call.1} parent=5 // pred_fallthru
        _
      %p222 = scmp.le.s32.totalorder 1, %s18
      %p223 = scmp.lt.s32.totalorder %s18, 3
      %p224 = pnand %p222, %p223
      %p225 = pneg %p224
      // Predicated region
      $region29: #{tpu_custom_call.1} parent=5 // pred_check
        _
      $region30: #{tpu_custom_call.1} parent=5 // pred_check_branch
        %227 = sbr.rel (%p224) target = $region32
      $region31: #{tpu_custom_call.1} parent=5 // pred_region
        %s228 = ssub.s32 %s18, 1
        %s229 = sand.u32 %s43, 1
        %s230 = scalar_lea.sflag [#allocation5], %s229
        %s231 = sand.u32 %s43, 1
        %s232 = smul.addr %s231, 8
        %s233 = scalar_lea.vmem [#allocation4], %s232
        // Predicated region
        $region33: #{tpu_custom_call.1} parent=31 // pred_check
          %p234 = pneg %p56
        $region34: #{tpu_custom_call.1} parent=31 // pred_check_branch
          %236 = sbr.rel (%p234) target = $region36
        $region35: #{tpu_custom_call.1} parent=31 // pred_region
          %238 = dma.done %s230, 128
        $region36: #{tpu_custom_call.1} parent=31 // pred_fallthru
          _
        // Predicated region
        $region37: #{tpu_custom_call.1} parent=31 // pred_check
          %p239 = pneg %p82
        $region38: #{tpu_custom_call.1} parent=31 // pred_check_branch
          %241 = sbr.rel (%p239) target = $region40
        $region39: #{tpu_custom_call.1} parent=31 // pred_region
          %243 = dma.done [#allocation8], 512
        $region40: #{tpu_custom_call.1} parent=31 // pred_fallthru
          _
        %s244 = sand.u32 %s43, 1
        %s245 = scalar_lea.sflag [#allocation5], %s244
        %s246 = sand.u32 %s43, 1
        %s247 = smul.addr %s246, 8
        %s248 = scalar_lea.vmem [#allocation4], %s247
        %p249 = pneg %p56
        %p250 = pneg %p53
        %p251 = pneg %p82
        %p252 = pneg %p79
        %p253 = scmp.lt.s32.totalorder %s28, 0
        %s254 = scalar_select %p253, %s28, 0
        %s255 = scalar_lea.vmem %s2, %s254
        %p256 = pneg %p108
        %p257 = pneg %p105
        %p258 = pneg %p136
        %p259 = pneg %p133
        %s260 = sand.u32 %s123, 1
        %s261 = scalar_lea.sflag [#allocation6], %s260
        %s262 = sand.u32 %s123, 1
        %s263 = smul.addr %s262, 8
        %s264 = scalar_lea.vmem [#allocation9], %s263
        %p265 = pneg %p162
        %p266 = pneg %p159
        %p267 = scmp.lt.s32.totalorder %s27, 1
        %s268 = scalar_select %p267, %s27, 1
        %s269 = smul.addr %s268, 8
        %s270 = scalar_lea.vmem %s4, %s269
        %p271 = scmp.lt.s32.totalorder %s28, 0
        %s272 = scalar_select %p271, %s28, 0
        %s273 = scalar_lea.vmem %s2, %s272
        %p274 = scmp.lt.s32.totalorder %s27, 1
        %s275 = scalar_select %p274, %s27, 1
        %s276 = smul.addr %s275, 8
        %s277 = scalar_lea.vmem %s4, %s276
        %p278 = scmp.eq.s32.totalorder %s28, 0
        // Predicated region
        $region41: #{tpu_custom_call.1} parent=31 // pred_check
          %p279 = pneg %p278
        $region42: #{tpu_custom_call.1} parent=31 // pred_check_branch
          %281 = sbr.rel (%p279) target = $region44
        $region43: #{tpu_custom_call.1} parent=31 // pred_region
          %vm282 = vcmask 7168
          %283 = vst.msk [vmem:[#allocation2] sm:$0xff] %vm282, -inf
          %284 = vst.msk [vmem:[#allocation3] sm:$0xff] %vm282, 0.0
        $region44: #{tpu_custom_call.1} parent=31 // pred_fallthru
          _
        %v285 = vld [vmem:[%s233] sm:$0xff]
        %v286 = vld [vmem:[#allocation7] sm:$0xff]
        %v287 = vld [vmem:[#allocation7 + $0x8] sm:$0xff]
        %v288 = vld [vmem:[#allocation7 + $0x10] sm:$0xff]
        %v289 = vld [vmem:[#allocation7 + $0x18] sm:$0xff]
        %v290 = vld [vmem:[%s273] sm:$0x1]
        %v292 = vperm.slane %v290, 0
        %vm294 = vcmask 261120
        %v296 = vsel %vm294, %v285, 0
        %298 = vmatpush.msra.mxu0 0.0
        %299 = vmatpush.msra.mxu0 0.0
        %300 = vmatpush.msra.mxu0 0.0
        %301 = vmatpush.msra.mxu0 0.0
        %302 = vmatpush.msra.mxu0 0.0
        %303 = vmatpush.msra.mxu0 0.0
        %304 = vmatpush.msra.mxu0 0.0
        %305 = vmatpush.msra.mxu0 0.0
        %306 = vmatpush.msra.mxu0 0.0
        %307 = vmatpush.msra.mxu0 0.0
        %308 = vmatpush.msra.mxu0 0.0
        %309 = vmatpush.msra.mxu0 0.0
        %310 = vmatpush.msra.mxu0 %v289
        %311 = vmatpush.msra.mxu0 %v288
        %312 = vmatpush.msra.mxu0 %v287
        %313 = vmatpush.msra.mxu0 %v286
        %314 = vmatmul.f32.gmra.mxu0 %v296
        %v315 = vpop.f32.mrf.mxu0
        %v316 = vadd.f32 %v292, %v315
        %317 = vdwg.mxu0
        %318 = vst [vmem:[%s264] sm:$0xff] %v316
        %319 = vmax.xlane.f32.xlu0 %v316
        %v320 = vpop.xlane.xlu0 %319
        %v321 = vld [vmem:[#allocation2] sm:$0xff]
        %v322 = vmax.f32 %v321, %v320
        %v323 = vsub.f32 %v321, %v322
        %v324 = vmul.f32 %v323, 1.442695
        %v325 = vpow.pop %v324
        %v326 = vld [vmem:[#allocation3] sm:$0xff]
        %v327 = vmul.f32 %v325, %v326
        %329 = vset.pattern.permute.xlu0 0
        %330 = vperm.xlu0 %329, %v322
        %v331 = vpop.permute.xlu0 %330
        %v333 = vsub.f32 %v316, %v331
        %v334 = vmul.f32 %v333, 1.442695
        %v335 = vpow.pop %v334
        %336 = vadd.xlane.f32.xlu0 %v335
        %v337 = vpop.xlane.xlu0 %336
        %v338 = vadd.f32 %v327, %v337
        %vm339 = vcmask 7168
        %340 = vst.msk [vmem:[#allocation3] sm:$0xff] %vm339, %v338
        %341 = vst.msk [vmem:[#allocation2] sm:$0xff] %vm339, %v322
        // Predicated region
        $region45: #{tpu_custom_call.1} parent=31 // pred_check
          %p342 = pneg %p278
        $region46: #{tpu_custom_call.1} parent=31 // pred_check_branch
          %344 = sbr.rel (%p342) target = $region48
        $region47: #{tpu_custom_call.1} parent=31 // pred_region
          %v345 = vld [vmem:[#allocation2] sm:$0xff]
          %v346 = vld [vmem:[#allocation3] sm:$0xff]
          %v347 = vlog2.pop %v346
          %v348 = vmul.f32 %v347, 0.6931472
          %v349 = vadd.f32 %v345, %v348
          %350 = vst.msk [vmem:[%s277] sm:$0xff] %vm339, %v349
        $region48: #{tpu_custom_call.1} parent=31 // pred_fallthru
          _
        %s351 = sand.u32 %s123, 1
        %s352 = scalar_lea.sflag [#allocation6], %s351
        %s353 = sand.u32 %s123, 1
        %s354 = smul.addr %s353, 8
        %s355 = scalar_lea.vmem [#allocation9], %s354
        %p356 = scmp.lt.s32.totalorder %s27, 1
        %s357 = scalar_select %p356, %s27, 1
        %s358 = smul.addr %s357, 8
        %s359 = scalar_lea.vmem %s4, %s358
        // Predicated region
        $region49: #{tpu_custom_call.1} parent=31 // pred_check
          %p360 = pneg %p133
        $region50: #{tpu_custom_call.1} parent=31 // pred_check_branch
          %362 = sbr.rel (%p360) target = $region52
        $region51: #{tpu_custom_call.1} parent=31 // pred_region
          %364 = vsyncadd %s352, 0
          %s365 = sadd.s32 %s28, %s27
          %s366 = smul.addr %s365, 8
          %s367 = scalar_lea.hbm %s3, %s366
          %s369 = sshll.u32 %s355, 4
          %s370 = int_to_ptr.vmem [resolvable:$true] %s369
          %s371 = sshll.u32 %s367, 4
          %s372 = int_to_ptr.hbm [resolvable:$true] %s371
          %374 = dma.vmem_to_hbm [thread:$0]  %s370, 128, %s372, %s352
        $region52: #{tpu_custom_call.1} parent=31 // pred_fallthru
          _
        // Predicated region
        $region53: #{tpu_custom_call.1} parent=31 // pred_check
          %p375 = pneg %p159
        $region54: #{tpu_custom_call.1} parent=31 // pred_check_branch
          %377 = sbr.rel (%p375) target = $region56
        $region55: #{tpu_custom_call.1} parent=31 // pred_region
          _
        $region56: #{tpu_custom_call.1} parent=31 // pred_fallthru
          _
      $region32: #{tpu_custom_call.1} parent=5 // pred_fallthru
        _
      %p378 = scmp.le.s32.totalorder 2, %s18
      // Predicated region
      $region57: #{tpu_custom_call.1} parent=5 // pred_check
        %p379 = pneg %p378
      $region58: #{tpu_custom_call.1} parent=5 // pred_check_branch
        %381 = sbr.rel (%p379) target = $region60
      $region59: #{tpu_custom_call.1} parent=5 // pred_region
        %s382 = ssub.s32 %s18, 2
        // Predicated region
        $region61: #{tpu_custom_call.1} parent=59 // pred_check
          %p383 = pneg %p139
        $region62: #{tpu_custom_call.1} parent=59 // pred_check_branch
          %385 = sbr.rel (%p383) target = $region64
        $region63: #{tpu_custom_call.1} parent=59 // pred_region
          %s386 = sand.u32 %s124, 1
          %s387 = scalar_lea.sflag [#allocation6], %s386
          %s388 = sand.u32 %s124, 1
          %s389 = smul.addr %s388, 8
          %s390 = scalar_lea.vmem [#allocation9], %s389
          %392 = dma.done %s387, 128
        $region64: #{tpu_custom_call.1} parent=59 // pred_fallthru
          _
        // Predicated region
        $region65: #{tpu_custom_call.1} parent=59 // pred_check
          %p393 = pneg %p165
        $region66: #{tpu_custom_call.1} parent=59 // pred_check_branch
          %395 = sbr.rel (%p393) target = $region68
        $region67: #{tpu_custom_call.1} parent=59 // pred_region
          %p396 = scmp.lt.s32.totalorder %s29, 1
          %s397 = scalar_select %p396, %s29, 1
          %s398 = smul.addr %s397, 8
          %s399 = scalar_lea.vmem %s4, %s398
        $region68: #{tpu_custom_call.1} parent=59 // pred_fallthru
          _
      $region60: #{tpu_custom_call.1} parent=5 // pred_fallthru
        _
    $region6: #{tpu_custom_call.1} parent=1 // loop_footer
      %s22 = sadd.s32 1, %s18
    $region7: #{tpu_custom_call.1} parent=1 // loop_footer_branch
      %17 = sbr.rel target = $region3
    $region8: #{tpu_custom_call.1} parent=1 // loop_exit
      _
    %400 = vsyncpa [#allocation5], 1
    %s401 = scalar_lea.sflag [#allocation5], 1
    %402 = vsyncpa %s401, 1
    %403 = vsyncpa [#allocation8], 1
    %404 = vsyncpa [#allocation6], 1
    %s405 = scalar_lea.sflag [#allocation6], 1
    %406 = vsyncpa %s405, 1

</llo_original>
